<compile_context>
chip_gen: v7x
topology: tpu7x:2x2x1
jax: 0.10.0
libtpu: 0.0.40
codegen_flags: <defaults>
</compile_context>

<pallas_src>
import functools

import jax
import jax.numpy as jnp
from jax.experimental import pallas as pl
from jax.experimental.pallas import tpu as pltpu


PROJ = 14  # mlp_proj[2] output width in the PyTorch module (collapsed away)


def _round_up(x, m):
    return (x + m - 1) // m * m


# ----------------------------------------------------------------------------
# Kernel
# ----------------------------------------------------------------------------
def spblock_kernel(x_ref, w1fx_ref, b1_ref, wcomb_ref, bf_ref, packed_ref, *,
                   hidden_pad):
    x = x_ref[...]                                                  # (TB, D) bf16

    # One MXU pass for both x-LHS matmuls: [ x@W1 | x@Wfc-slab ]  (f32 acc)
    big = jnp.dot(x, w1fx_ref[...], preferred_element_type=jnp.float32)

    # mlp_proj[0] + ReLU (padded hidden lanes stay exactly zero).
    h = jnp.maximum(big[:, :hidden_pad] + b1_ref[...], 0.0)        # (TB, Hp) f32

    # Heads, lane-dense slab [ out | mcl | open | 0-pad ]:
    #   x @ Wfx  +  h @ (W2 @ [0|Wmcl|Wop])  +  fused biases
    # (exact collapse of mlp_proj[2] + mclhead + opclassifier).
    acc = big[:, hidden_pad:] + jnp.dot(h.astype(jnp.bfloat16), wcomb_ref[...],
                                        preferred_element_type=jnp.float32)
    packed_ref[...] = (acc + bf_ref[...]).astype(packed_ref.dtype)


# ----------------------------------------------------------------------------
# Wrapper-side parameter packing (done once, outside the kernel)
# ----------------------------------------------------------------------------
def pack_params(params, input_dim, num_classes):
    D, C = input_dim, num_classes
    H_pad = _round_up(D, 128)                      # lane-aligned hidden split
    p_out = max(128, _round_up(4 * C + 1, 128))    # lane-dense head slab

    # Head column layout: [0,C) = fc, [C,3C) = mclhead, [3C,4C+1) = opclassifier.
    wfx = jnp.zeros((D, p_out), jnp.float32).at[:, 0:C].set(params["wfc"])
    wfp = jnp.zeros((PROJ, p_out), jnp.float32)
    wfp = wfp.at[:, C:3 * C].set(params["wmcl"])
    wfp = wfp.at[:, 3 * C:4 * C + 1].set(params["wop"])

    # Compose the projection through the heads (exact: no nonlinearity between).
    wcomb = jnp.zeros((H_pad, p_out), jnp.float32).at[:D, :].set(
        params["w2"] @ wfp)

    # Fused x-LHS slab: [ W1 (padded to H_pad cols) | Wfx ].
    w1fx = jnp.zeros((D, H_pad + p_out), jnp.float32)
    w1fx = w1fx.at[:, :D].set(params["w1"])
    w1fx = w1fx.at[:, H_pad:].set(wfx)

    b1 = jnp.zeros((1, H_pad), jnp.float32).at[0, :D].set(
        params["b1"].reshape(-1))

    bf = jnp.zeros((1, p_out), jnp.float32)
    bf = bf.at[0, 0:C].set(params["bfc"].reshape(-1))
    bf = bf.at[0, C:3 * C].set(params["bmcl"].reshape(-1))
    bf = bf.at[0, 3 * C:4 * C + 1].set(params["bop"].reshape(-1))
    bf = bf + params["b2"].reshape(1, PROJ) @ wfp   # fold b2 through the heads

    return dict(w1fx=w1fx.astype(jnp.bfloat16),
                b1=b1,
                wcomb=wcomb.astype(jnp.bfloat16),
                bf=bf)


# ----------------------------------------------------------------------------
# Forward
# ----------------------------------------------------------------------------
@functools.partial(jax.jit, static_argnames=("input_dim", "num_classes"))
def spblock_forward(x, packed, *, input_dim, num_classes):
    D, C = input_dim, num_classes
    B = x.shape[0]
    H_pad = packed["b1"].shape[1]
    p_out = packed["bf"].shape[1]

    # Batch tiling: large tiles amortize per-step pipeline overhead, but keep
    # >= 2 grid steps when the batch allows so the "parallel" axis can shard
    # across the 2 TensorCores on v7x (harmless on v5e/v6e).
    ALIGN = 16          # bf16 sublane pack
    CAP = 2048
    TB = _round_up(max(B, 1), ALIGN)
    if B >= 2 * ALIGN:
        TB = min(TB, _round_up(-(-B // 2), ALIGN))
    TB = min(TB, CAP)
    B_pad = _round_up(B, TB)

    xb = x.astype(jnp.bfloat16)
    if B_pad != B:
        xb = jnp.pad(xb, ((0, B_pad - B), (0, 0)))

    grid = (B_pad // TB,)

    def resident(shape):
        # Full-array block + constant index_map: fetched once, stays in VMEM.
        # For very large input_dim (v7x 64 MiB VMEM) tile this along K with an
        # "arbitrary" grid axis instead of keeping it fully resident.
        return pl.BlockSpec(shape, lambda i: (0, 0))

    flops = 2 * B_pad * (D * (H_pad + p_out) + H_pad * p_out)
    bytes_accessed = (
        xb.size * 2
        + (packed["w1fx"].size + packed["wcomb"].size) * 2
        + (packed["b1"].size + packed["bf"].size) * 4
        + B_pad * p_out * 2
    )

    out_packed = pl.pallas_call(
        functools.partial(spblock_kernel, hidden_pad=H_pad),
        out_shape=jax.ShapeDtypeStruct((B_pad, p_out), jnp.bfloat16),
        grid=grid,
        in_specs=[
            pl.BlockSpec((TB, D), lambda i: (i, 0)),        # x (pipelined)
            resident((D, H_pad + p_out)),                   # [ W1 | Wfx ]
            resident((1, H_pad)),                           # b1
            resident((H_pad, p_out)),                       # W2 @ [0|Wmcl|Wop]
            resident((1, p_out)),                           # fused head biases
        ],
        out_specs=pl.BlockSpec((TB, p_out), lambda i: (i, 0)),
        compiler_params=pltpu.CompilerParams(
            dimension_semantics=("parallel",),
            vmem_limit_bytes=32 * 1024 * 1024,
        ),
        cost_estimate=pl.CostEstimate(
            flops=int(flops), transcendentals=0,
            bytes_accessed=int(bytes_accessed)),
    )(xb, packed["w1fx"], packed["b1"], packed["wcomb"], packed["bf"])

    slab = out_packed[:B].astype(jnp.float32)
    return {"open": slab[:, 3 * C:4 * C + 1],
            "mcl": slab[:, C:3 * C],
            "out": slab[:, 0:C]}


# ----------------------------------------------------------------------------
# Parameter init (weights stored (in, out), bias (out,))
# ----------------------------------------------------------------------------
def init_params(key, input_dim, num_classes):
    ks = jax.random.split(key, 10)

    def lin(kw, kb, fan_in, fan_out):
        scale = 1.0 / jnp.sqrt(jnp.float32(fan_in))
        w = jax.random.uniform(kw, (fan_in, fan_out), jnp.float32, -scale, scale)
        b = jax.random.uniform(kb, (fan_out,), jnp.float32, -scale, scale)
        return w, b

    w1, b1 = lin(ks[0], ks[1], input_dim, input_dim)           # mlp_proj[0]
    w2, b2 = lin(ks[2], ks[3], input_dim, PROJ)                # mlp_proj[2]
    wfc, bfc = lin(ks[4], ks[5], input_dim, num_classes)       # fc
    wmcl, bmcl = lin(ks[6], ks[7], PROJ, 2 * num_classes)      # mclhead
    wop, bop = lin(ks[8], ks[9], PROJ, num_classes + 1)        # opclassifier
    return dict(w1=w1, b1=b1, w2=w2, b2=b2, wfc=wfc, bfc=bfc,
                wmcl=wmcl, bmcl=bmcl, wop=wop, bop=bop)


# ----------------------------------------------------------------------------
# References
# ----------------------------------------------------------------------------
def spblock_reference_f32(x, p):
    """PyTorch-equivalent pure-f32 forward."""
    h = jnp.maximum(x @ p["w1"] + p["b1"], 0.0)
    proj = h @ p["w2"] + p["b2"]
    return {"open": proj @ p["wop"] + p["bop"],
            "mcl": proj @ p["wmcl"] + p["bmcl"],
            "out": x @ p["wfc"] + p["bfc"]}


def spblock_reference_quant(x, packed, input_dim, num_classes):
    """Mirrors the kernel's exact quantization points (bf16 operands, f32
    accumulation, composed W2@heads, bf16 output slab)."""
    C = num_classes
    H_pad = packed["b1"].shape[1]
    xb = x.astype(jnp.bfloat16)
    big = jnp.dot(xb, packed["w1fx"], preferred_element_type=jnp.float32)
    h = jnp.maximum(big[:, :H_pad] + packed["b1"], 0.0)
    acc = big[:, H_pad:] + jnp.dot(h.astype(jnp.bfloat16), packed["wcomb"],
                                   preferred_element_type=jnp.float32)
    slab = (acc + packed["bf"]).astype(jnp.bfloat16).astype(jnp.float32)
    return {"open": slab[:, 3 * C:4 * C + 1],
            "mcl": slab[:, C:3 * C],
            "out": slab[:, 0:C]}


if __name__ == "__main__":
    key = jax.random.PRNGKey(0)
    kx, kp = jax.random.split(key)

    B, input_dim, num_classes = 8, 32, 4
    x = jax.random.normal(kx, (B, input_dim), jnp.float32)
    params = init_params(kp, input_dim, num_classes)
    packed = pack_params(params, input_dim, num_classes)

    result = spblock_forward(x, packed, input_dim=input_dim,
                             num_classes=num_classes)
    jax.block_until_ready(result)

    ref_q = spblock_reference_quant(x, packed, input_dim, num_classes)
    ref_f = spblock_reference_f32(x, params)

    for k in ("open", "mcl", "out"):
        assert result[k].shape == ref_f[k].shape, (k, result[k].shape, ref_f[k].shape)
        assert jnp.allclose(result[k], ref_q[k], atol=1e-2, rtol=1e-2), k
        assert jnp.allclose(result[k], ref_f[k], atol=6e-2, rtol=6e-2), k

    print("KERNEL_OK")
</pallas_src>

<mosaic_0001>
module attributes {stable_mosaic.version = 11 : i64} {
  func.func @spblock_kernel(%arg0: i32, %arg1: memref<16x32xbf16, #tpu.memory_space<vmem>>, %arg2: memref<32x256xbf16, #tpu.memory_space<vmem>>, %arg3: memref<1x128xf32, #tpu.memory_space<vmem>>, %arg4: memref<128x128xbf16, #tpu.memory_space<vmem>>, %arg5: memref<1x128xf32, #tpu.memory_space<vmem>>, %arg6: memref<16x128xbf16, #tpu.memory_space<vmem>>) attributes {dimension_semantics = [#tpu.dimension_semantics<parallel>], iteration_bounds = array<i64: 1>, scalar_prefetch = 0 : i64, scratch_operands = 0 : i64, tpu.core_type = #tpu.core_type<tc>, window_params = [{transform_indices = @transform_0, window_bounds = array<i64: 16, 32>}, {pipeline_mode = #tpu.pipeline_mode<synchronous>, transform_indices = @transform_1, window_bounds = array<i64: 32, 256>}, {pipeline_mode = #tpu.pipeline_mode<synchronous>, transform_indices = @transform_2, window_bounds = array<i64: 1, 128>}, {pipeline_mode = #tpu.pipeline_mode<synchronous>, transform_indices = @transform_3, window_bounds = array<i64: 128, 128>}, {pipeline_mode = #tpu.pipeline_mode<synchronous>, transform_indices = @transform_4, window_bounds = array<i64: 1, 128>}, {transform_indices = @transform_5, window_bounds = array<i64: 16, 128>}]} {
    %c0 = arith.constant 0 : index
    %c0_0 = arith.constant 0 : index
    %0 = vector.load %arg1[%c0, %c0_0] : memref<16x32xbf16, #tpu.memory_space<vmem>>, vector<16x32xbf16>
    %c0_1 = arith.constant 0 : index
    %c0_2 = arith.constant 0 : index
    %1 = vector.load %arg2[%c0_1, %c0_2] : memref<32x256xbf16, #tpu.memory_space<vmem>>, vector<32x256xbf16>
    %cst = arith.constant dense<0.000000e+00> : vector<16x256xf32>
    %2 = tpu.matmul %0, %1, %cst {dimension_numbers = #tpu.dot_dimension_numbers<[1], [0], [0], [1], [0, 0, 1, 1], [], []>} : vector<16x32xbf16>, vector<32x256xbf16>, vector<16x256xf32> -> vector<16x256xf32>
    %3 = vector.extract_strided_slice %2 {offsets = [0, 0], sizes = [16, 128], strides = [1, 1]} : vector<16x256xf32> to vector<16x128xf32>
    %c0_3 = arith.constant 0 : index
    %c0_4 = arith.constant 0 : index
    %4 = vector.load %arg3[%c0_3, %c0_4] : memref<1x128xf32, #tpu.memory_space<vmem>>, vector<1x128xf32>
    %5 = vector.broadcast %4 : vector<1x128xf32> to vector<16x128xf32>
    %6 = arith.addf %3, %5 : vector<16x128xf32>
    %cst_5 = arith.constant 0.000000e+00 : f32
    %7 = vector.broadcast %cst_5 : f32 to vector<16x128xf32>
    %8 = arith.maximumf %6, %7 : vector<16x128xf32>
    %9 = vector.extract_strided_slice %2 {offsets = [0, 128], sizes = [16, 128], strides = [1, 1]} : vector<16x256xf32> to vector<16x128xf32>
    %10 = arith.truncf %8 : vector<16x128xf32> to vector<16x128xbf16>
    %c0_6 = arith.constant 0 : index
    %c0_7 = arith.constant 0 : index
    %11 = vector.load %arg4[%c0_6, %c0_7] : memref<128x128xbf16, #tpu.memory_space<vmem>>, vector<128x128xbf16>
    %cst_8 = arith.constant dense<0.000000e+00> : vector<16x128xf32>
    %12 = tpu.matmul %10, %11, %cst_8 {dimension_numbers = #tpu.dot_dimension_numbers<[1], [0], [0], [1], [0, 0, 1, 1], [], []>} : vector<16x128xbf16>, vector<128x128xbf16>, vector<16x128xf32> -> vector<16x128xf32>
    %13 = arith.addf %9, %12 : vector<16x128xf32>
    %c0_9 = arith.constant 0 : index
    %c0_10 = arith.constant 0 : index
    %14 = vector.load %arg5[%c0_9, %c0_10] : memref<1x128xf32, #tpu.memory_space<vmem>>, vector<1x128xf32>
    %15 = vector.broadcast %14 : vector<1x128xf32> to vector<16x128xf32>
    %16 = arith.addf %13, %15 : vector<16x128xf32>
    %17 = arith.truncf %16 : vector<16x128xf32> to vector<16x128xbf16>
    %c0_11 = arith.constant 0 : index
    %c0_12 = arith.constant 0 : index
    %18 = vector.load %arg6[%c0_11, %c0_12] : memref<16x128xbf16, #tpu.memory_space<vmem>>, vector<16x128xbf16>
    tpu.vector_store %arg6[%c0_11, %c0_12], %17 {strides = array<i32>} : memref<16x128xbf16, #tpu.memory_space<vmem>>, vector<16x128xbf16>,
    return
  }
  func.func @transform_0(%arg0: i32) -> (i32, i32) {
    %c0_i32 = arith.constant 0 : i32
    %c0_i32_0 = arith.constant 0 : i32
    return %arg0, %c0_i32 : i32, i32
  }
  func.func @transform_1(%arg0: i32) -> (i32, i32) {
    %c0_i32 = arith.constant 0 : i32
    %c0_i32_0 = arith.constant 0 : i32
    %c0_i32_1 = arith.constant 0 : i32
    return %c0_i32, %c0_i32_0 : i32, i32
  }
  func.func @transform_2(%arg0: i32) -> (i32, i32) {
    %c0_i32 = arith.constant 0 : i32
    %c0_i32_0 = arith.constant 0 : i32
    %c0_i32_1 = arith.constant 0 : i32
    return %c0_i32, %c0_i32_0 : i32, i32
  }
  func.func @transform_3(%arg0: i32) -> (i32, i32) {
    %c0_i32 = arith.constant 0 : i32
    %c0_i32_0 = arith.constant 0 : i32
    %c0_i32_1 = arith.constant 0 : i32
    return %c0_i32, %c0_i32_0 : i32, i32
  }
  func.func @transform_4(%arg0: i32) -> (i32, i32) {
    %c0_i32 = arith.constant 0 : i32
    %c0_i32_0 = arith.constant 0 : i32
    %c0_i32_1 = arith.constant 0 : i32
    return %c0_i32, %c0_i32_0 : i32, i32
  }
  func.func @transform_5(%arg0: i32) -> (i32, i32) {
    %c0_i32 = arith.constant 0 : i32
    %c0_i32_0 = arith.constant 0 : i32
    return %arg0, %c0_i32 : i32, i32
  }
}

</mosaic_0001>

<llo_original>
// kernel: spblock_forward.1
$region0: #{spblock_forward.1}
  #allocation0 [shape = 'u32[]', space=smem, size = 0x4, offset = 0x4, fixed_abs, tag = 'smem constant byte address 0x4 - core index']
  #allocation1 [shape = 'u32[144,128]{1,0:T(1,128)}', space=vmem, size = 0x12000, scoped, tag = 'internal scratch']
  %s0 = inlined_call_operand.vmem [shape: bf16[16,32], index: 0, kind: input, shape index: {}]
  %s1 = inlined_call_operand.vmem [shape: bf16[32,256], index: 1, kind: input, shape index: {}]
  %s2 = inlined_call_operand.vmem [shape: f32[1,128], index: 2, kind: input, shape index: {}]
  %s3 = inlined_call_operand.hbm [shape: bf16[128,128], index: 3, kind: input, shape index: {}]
  %s4 = inlined_call_operand.vmem [shape: f32[1,128], index: 4, kind: input, shape index: {}]
  %s5 = inlined_call_operand.vmem [shape: bf16[16,128], index: 5, kind: output, shape index: {}]
  %s6 = sld [smem:[#allocation0]]
  $region34: #{spblock_forward.1} parent=0
    _
  %s8 = ssub.s32 1, %s6
  %s9 = scalar_select 0, %s8, %s6
  $region1: #{spblock_forward.1} parent=0
    #allocation2 [shape = 'u8[32768]{0}', space=vmem, size = 0x8000, scoped, tag = 'input window, operand 3, single buffered']
    #allocation3 [shape = 's32[1]{0}', space=sflag, size = 0x4, scoped, tag = 'scoped memory for spblock_forward.1']
    %10 = vsyncpa [#allocation3], 0
    // Predicated region
    $region2: #{spblock_forward.1} parent=1 // pred_check
      _
    $region3: #{spblock_forward.1} parent=1 // pred_check_branch
      %12 = sbr.rel (0) target = $region5
    $region4: #{spblock_forward.1} parent=1 // pred_region
      _
    $region5: #{spblock_forward.1} parent=1 // pred_fallthru
      _
    // Predicated region
    $region6: #{spblock_forward.1} parent=1 // pred_check
      _
    $region7: #{spblock_forward.1} parent=1 // pred_check_branch
      %14 = sbr.rel (0) target = $region9
    $region8: #{spblock_forward.1} parent=1 // pred_region
      _
    $region9: #{spblock_forward.1} parent=1 // pred_fallthru
      _
    // Predicated region
    $region10: #{spblock_forward.1} parent=1 // pred_check
      _
    $region11: #{spblock_forward.1} parent=1 // pred_check_branch
      %16 = sbr.rel (0) target = $region13
    $region12: #{spblock_forward.1} parent=1 // pred_region
      _
    $region13: #{spblock_forward.1} parent=1 // pred_fallthru
      _
    // Predicated region
    $region14: #{spblock_forward.1} parent=1 // pred_check
      _
    $region15: #{spblock_forward.1} parent=1 // pred_check_branch
      %18 = sbr.rel (0) target = $region17
    $region16: #{spblock_forward.1} parent=1 // pred_region
      %s20 = ssub.s32 1024, 1024
      %21 = vsyncadd [#allocation3], %s20
      %s22 = sshll.u32 [#allocation2], 4
      %s23 = int_to_ptr.vmem [resolvable:$true] %s22
      %28 = dma.hbm_to_vmem [thread:$0]  %s3, 1024, %s23, [#allocation3], 64, 64, 4
    $region17: #{spblock_forward.1} parent=1 // pred_fallthru
      _
    // Predicated region
    $region18: #{spblock_forward.1} parent=1 // pred_check
      _
    $region19: #{spblock_forward.1} parent=1 // pred_check_branch
      %30 = sbr.rel (0) target = $region21
    $region20: #{spblock_forward.1} parent=1 // pred_region
      _
    $region21: #{spblock_forward.1} parent=1 // pred_fallthru
      _
    // Predicated region
    $region22: #{spblock_forward.1} parent=1 // pred_check
      _
    $region23: #{spblock_forward.1} parent=1 // pred_check_branch
      %32 = sbr.rel (0) target = $region25
    $region24: #{spblock_forward.1} parent=1 // pred_region
      %33 = dma.done [#allocation3], 1024
    $region25: #{spblock_forward.1} parent=1 // pred_fallthru
      _
    %v35 = vld [vmem:[%s0] sm:$0xf]
    %v36 = vld [vmem:[%s0 + $0x4] sm:$0xf]
    %v37 = vld [vmem:[%s1] sm:$0xff]
    %v38 = vld [vmem:[%s1 + $0x8] sm:$0xff]
    %v39 = vld [vmem:[%s1 + $0x10] sm:$0xff]
    %v40 = vld [vmem:[%s1 + $0x18] sm:$0xff]
    %v43 = vunpack.c.l.b16 %v35
    %v44 = vunpack.c.l.b16 %v36
    %v45 = vpack.c.b16 %v44, %v43
    %v50 = vunpack.c.l.b16 %v37
    %v51 = vunpack.c.h.b16 %v37
    %v52 = vunpack.c.l.b16 %v38
    %v53 = vunpack.c.h.b16 %v38
    %v54 = vunpack.c.l.b16 %v39
    %v55 = vunpack.c.h.b16 %v39
    %v56 = vunpack.c.l.b16 %v40
    %v57 = vunpack.c.h.b16 %v40
    %v58 = vpack.c.b16 %v52, %v50
    %v59 = vpack.c.b16 %v53, %v51
    %v60 = vpack.c.b16 %v56, %v54
    %v61 = vpack.c.b16 %v57, %v55
    %vm66 = vcmask 261120
    %v68 = vsel %vm66, %v45, 0
    %70 = vmatprep.subr.bf16.mxu0 %v59
    %71 = vmatpush1.bf16.msra.mxu0 %v58
    %72 = vmatprep.subr.bf16.mxu0 %v61
    %73 = vmatpush1.bf16.msra.mxu0 %v60
    %74 = vmatprep.subr.bf16.mxu0 0
    %75 = vmatpush1.bf16.msra.mxu0 0
    %76 = vmatprep.subr.bf16.mxu0 0
    %77 = vmatpush1.bf16.msra.mxu0 0
    %78 = vmatprep.subr.bf16.mxu0 0
    %79 = vmatpush1.bf16.msra.mxu0 0
    %80 = vmatprep.subr.bf16.mxu0 0
    %81 = vmatpush1.bf16.msra.mxu0 0
    %82 = vmatprep.subr.bf16.mxu0 0
    %83 = vmatpush1.bf16.msra.mxu0 0
    %84 = vmatprep.subr.bf16.mxu0 0
    %85 = vmatpush1.bf16.msra.mxu0 0
    %86 = vmatprep.subr.bf16.mxu0 0
    %87 = vmatpush1.bf16.msra.mxu0 0
    %88 = vmatprep.subr.bf16.mxu0 0
    %89 = vmatpush1.bf16.msra.mxu0 0
    %90 = vmatprep.subr.bf16.mxu0 0
    %91 = vmatpush1.bf16.msra.mxu0 0
    %92 = vmatprep.subr.bf16.mxu0 0
    %93 = vmatpush1.bf16.msra.mxu0 0
    %94 = vmatprep.subr.bf16.mxu0 0
    %95 = vmatpush1.bf16.msra.mxu0 0
    %96 = vmatprep.subr.bf16.mxu0 0
    %97 = vmatpush1.bf16.msra.mxu0 0
    %98 = vmatprep.subr.bf16.mxu0 0
    %99 = vmatpush1.bf16.msra.mxu0 0
    %100 = vmatprep.subr.bf16.mxu0 0
    %101 = vmatpush1.bf16.msra.mxu0 0
    %102 = vmatprep.mubr.bf16.mxu0 0
    %103 = vmatmul.mubr.bf16.gmra.mrb[0].mxu0 %v68
    %v104 = vpop.f32.mrb[0].mxu0
    %v105 = vadd.f32 0.0, %v104
    %v106 = vpop.f32.mrb[0].mxu0
    %v107 = vadd.f32 0.0, %v106
    %v108 = vpop.f32.mrb[0].mxu0
    %v109 = vadd.f32 0.0, %v108
    %v110 = vpop.f32.mrb[0].mxu0
    %v111 = vadd.f32 0.0, %v110
    %112 = vdwg.mxu0
    %v113 = vld [vmem:[%s2] sm:$0x1]
    %v115 = vlaneseq
    %v116 = vshrl.u32 %v115, 7
    %v117 = vsub.s32 0, %v116
    %v118 = vrot.slane %v113, %v117
    %v120 = vadd.f32 %v105, %v118
    %v121 = vadd.f32 %v109, %v118
    %v122 = vmax.f32 %v120, 0.0
    %v123 = vmax.f32 %v121, 0.0
    %v124 = vpack.c.bf16 %v123, %v122
    %v125 = vld [vmem:[#allocation2] sm:$0xf]
    %v126 = vld [vmem:[#allocation2 + $0x4] sm:$0xf]
    %v127 = vld [vmem:[#allocation2 + $0x8] sm:$0xf]
    %v128 = vld [vmem:[#allocation2 + $0xc] sm:$0xf]
    %v129 = vld [vmem:[#allocation2 + $0x10] sm:$0xf]
    %v130 = vld [vmem:[#allocation2 + $0x14] sm:$0xf]
    %v131 = vld [vmem:[#allocation2 + $0x18] sm:$0xf]
    %v132 = vld [vmem:[#allocation2 + $0x1c] sm:$0xf]
    %v133 = vld [vmem:[#allocation2 + $0x20] sm:$0xf]
    %v134 = vld [vmem:[#allocation2 + $0x24] sm:$0xf]
    %v135 = vld [vmem:[#allocation2 + $0x28] sm:$0xf]
    %v136 = vld [vmem:[#allocation2 + $0x2c] sm:$0xf]
    %v137 = vld [vmem:[#allocation2 + $0x30] sm:$0xf]
    %v138 = vld [vmem:[#allocation2 + $0x34] sm:$0xf]
    %v139 = vld [vmem:[#allocation2 + $0x38] sm:$0xf]
    %v140 = vld [vmem:[#allocation2 + $0x3c] sm:$0xf]
    %v157 = vunpack.c.l.b16 %v125
    %v158 = vunpack.c.l.b16 %v126
    %v159 = vunpack.c.l.b16 %v127
    %v160 = vunpack.c.l.b16 %v128
    %v161 = vunpack.c.l.b16 %v129
    %v162 = vunpack.c.l.b16 %v130
    %v163 = vunpack.c.l.b16 %v131
    %v164 = vunpack.c.l.b16 %v132
    %v165 = vunpack.c.l.b16 %v133
    %v166 = vunpack.c.l.b16 %v134
    %v167 = vunpack.c.l.b16 %v135
    %v168 = vunpack.c.l.b16 %v136
    %v169 = vunpack.c.l.b16 %v137
    %v170 = vunpack.c.l.b16 %v138
    %v171 = vunpack.c.l.b16 %v139
    %v172 = vunpack.c.l.b16 %v140
    %v173 = vpack.c.b16 %v158, %v157
    %v174 = vpack.c.b16 %v160, %v159
    %v175 = vpack.c.b16 %v162, %v161
    %v176 = vpack.c.b16 %v164, %v163
    %v177 = vpack.c.b16 %v166, %v165
    %v178 = vpack.c.b16 %v168, %v167
    %v179 = vpack.c.b16 %v170, %v169
    %v180 = vpack.c.b16 %v172, %v171
    %189 = vmatprep.subr.bf16.mxu0 0
    %190 = vmatpush1.bf16.msra.mxu0 %v173
    %191 = vmatprep.subr.bf16.mxu0 0
    %192 = vmatpush1.bf16.msra.mxu0 %v174
    %193 = vmatprep.subr.bf16.mxu0 0
    %194 = vmatpush1.bf16.msra.mxu0 %v175
    %195 = vmatprep.subr.bf16.mxu0 0
    %196 = vmatpush1.bf16.msra.mxu0 %v176
    %197 = vmatprep.subr.bf16.mxu0 0
    %198 = vmatpush1.bf16.msra.mxu0 %v177
    %199 = vmatprep.subr.bf16.mxu0 0
    %200 = vmatpush1.bf16.msra.mxu0 %v178
    %201 = vmatprep.subr.bf16.mxu0 0
    %202 = vmatpush1.bf16.msra.mxu0 %v179
    %203 = vmatprep.subr.bf16.mxu0 0
    %204 = vmatpush1.bf16.msra.mxu0 %v180
    %205 = vmatprep.subr.bf16.mxu0 0
    %206 = vmatpush1.bf16.msra.mxu0 0
    %207 = vmatprep.subr.bf16.mxu0 0
    %208 = vmatpush1.bf16.msra.mxu0 0
    %209 = vmatprep.subr.bf16.mxu0 0
    %210 = vmatpush1.bf16.msra.mxu0 0
    %211 = vmatprep.subr.bf16.mxu0 0
    %212 = vmatpush1.bf16.msra.mxu0 0
    %213 = vmatprep.subr.bf16.mxu0 0
    %214 = vmatpush1.bf16.msra.mxu0 0
    %215 = vmatprep.subr.bf16.mxu0 0
    %216 = vmatpush1.bf16.msra.mxu0 0
    %217 = vmatprep.subr.bf16.mxu0 0
    %218 = vmatpush1.bf16.msra.mxu0 0
    %219 = vmatprep.subr.bf16.mxu0 0
    %220 = vmatpush1.bf16.msra.mxu0 0
    %221 = vmatprep.mubr.bf16.mxu0 0
    %222 = vmatmul.mubr.bf16.gmra.mrb[0].mxu0 %v124
    %v223 = vpop.f32.mrb[0].mxu0
    %v224 = vadd.f32 0.0, %v223
    %v225 = vpop.f32.mrb[0].mxu0
    %v226 = vpop.f32.mrb[0].mxu0
    %v227 = vadd.f32 0.0, %v226
    %v228 = vpop.f32.mrb[0].mxu0
    %229 = vdwg.mxu0
    %v230 = vadd.f32 %v107, %v224
    %v231 = vadd.f32 %v111, %v227
    %v232 = vld [vmem:[%s4] sm:$0x1]
    %v234 = vlaneseq
    %v235 = vshrl.u32 %v234, 7
    %v236 = vsub.s32 0, %v235
    %v237 = vrot.slane %v232, %v236
    %v239 = vadd.f32 %v230, %v237
    %v240 = vadd.f32 %v231, %v237
    %v241 = vpack.c.bf16 %v240, %v239
    %v243 = vunpack.c.l.b16 %v241
    %v244 = vunpack.c.h.b16 %v241
    %v245 = vpack.c.b16 %v243, %v243
    %v246 = vpack.c.b16 %v244, %v244
    %249 = vst [vmem:[%s5] sm:$0xf] %v245
    %250 = vst [vmem:[%s5 + $0x4] sm:$0xf] %v246
    // Predicated region
    $region26: #{spblock_forward.1} parent=1 // pred_check
      _
    $region27: #{spblock_forward.1} parent=1 // pred_check_branch
      %252 = sbr.rel (0) target = $region29
    $region28: #{spblock_forward.1} parent=1 // pred_region
      _
    $region29: #{spblock_forward.1} parent=1 // pred_fallthru
      _
    // Predicated region
    $region30: #{spblock_forward.1} parent=1 // pred_check
      _
    $region31: #{spblock_forward.1} parent=1 // pred_check_branch
      %254 = sbr.rel (0) target = $region33
    $region32: #{spblock_forward.1} parent=1 // pred_region
      _
    $region33: #{spblock_forward.1} parent=1 // pred_fallthru
      _
    %255 = vsyncpa [#allocation3], 1

</llo_original>
